<compile_context>
chip_gen: v7x
topology: tpu7x:2x2x1
jax: 0.10.0
libtpu: 0.0.40
codegen_flags: <defaults>
</compile_context>

<pallas_src>
import functools

import jax
import jax.numpy as jnp
from jax.experimental import pallas as pl
from jax.experimental.pallas import tpu as pltpu

LN_EPS = 1e-5
LANE = 128
SUBLANE = 8
MIB = 1024 * 1024


# ------------------------------ helpers -------------------------------------
def _round_up(n, m):
    return (n + m - 1) // m * m


def _round_down(n, m):
    return (n // m) * m


def _pad_axis(a, target, axis):
    pad = target - a.shape[axis]
    if pad <= 0:
        return a
    widths = [(0, 0)] * a.ndim
    widths[axis] = (0, pad)
    return jnp.pad(a, widths)


def _compute_dtype(dtype):
    # Keep bf16 operands for the MXU (v6e/v7x native); everything else in f32.
    return jnp.bfloat16 if dtype == jnp.bfloat16 else jnp.float32


def _tpu_info():
    """Best-effort (vmem_capacity_bytes, mxu_align, tensorcores_per_chip)."""
    kind = ""
    try:
        kind = jax.devices()[0].device_kind.lower()
    except Exception:
        pass
    cap = None
    get_info = getattr(pltpu, "get_tpu_info", None)
    if get_info is not None:
        try:
            cap = getattr(get_info(), "vmem_capacity_bytes", None)
        except Exception:
            cap = None
    is_v7 = "v7" in kind
    newer = any(t in kind for t in ("v6", "v7"))
    if cap is None or cap <= 0:
        # v7x: 64 MiB per TensorCore; unknown chip: stay conservative.
        cap = (64 * MIB) if (is_v7 or not kind) else (128 * MIB)
    align = 256 if newer else 128   # MXU is 2x256^2 on v6e/v7x, 4x128^2 on v5e
    cores = 2 if is_v7 else 1       # v7x has 2 TensorCores per chip
    return int(cap), align, cores


def _layer_norm_rows(x_f32, inv_d, n_pad, gamma=None, beta=None):
    """Row-wise LayerNorm in f32 with two-pass (mean-subtracted) variance.
    `x_f32` may be zero-padded along the last axis by `n_pad` columns; the
    statistics are corrected so they match the unpadded feature width."""
    mean = jnp.sum(x_f32, axis=-1, keepdims=True) * inv_d
    xc = x_f32 - mean
    ssq = jnp.sum(xc * xc, axis=-1, keepdims=True)
    if n_pad:
        # Each zero-padded column contributed (0 - mean)^2 = mean^2.
        ssq = ssq - float(n_pad) * (mean * mean)
    var = jnp.maximum(ssq * inv_d, 0.0)
    y = xc * jax.lax.rsqrt(var + LN_EPS)
    if gamma is not None:
        y = y * gamma + beta
    return y


def _choose_tiles(rows, d_in_p, d_out_p, x_itemsize, w_itemsize, cap, align, cores):
    """Generation-aware tiling:
      * whole weight kept VMEM-resident when it fits (constant block index ->
        fetched from HBM exactly once),
      * row tiles as large as the VMEM budget allows (amortizes any weight
        re-streaming), 256-aligned on v6e/v7x, 128-aligned on v5e,
      * never the 8-row MXU-starving floor on the fused path,
      * >= `cores` row tiles on dual-TensorCore parts (v7x megacore)."""
    budget = int(cap * 0.70)                        # headroom for compiler scratch

    # Output-column (weight) tile: (d_in_p, tile_n).
    w_row_bytes = d_in_p * w_itemsize
    w_cap = min(max(budget // 3, 2 * MIB), 16 * MIB)
    if d_out_p * w_row_bytes <= w_cap:
        tile_n = d_out_p                            # whole W is VMEM-resident
    else:
        tile_n = min(max(_round_down(w_cap // w_row_bytes, align), LANE), d_out_p)
    w_bytes = 2 * d_in_p * tile_n * w_itemsize      # double-buffered worst case

    # Row tile: x tile + out tile (double-buffered) + normalized scratch.
    per_row = (2 * d_in_p + 2 * tile_n) * x_itemsize + d_in_p * w_itemsize
    t = max((budget - w_bytes) // per_row, SUBLANE)
    t = min(t, 2048)
    if rows <= t:
        tile_rows = rows                            # full-extent block is legal
    else:
        tile_rows = max(_round_down(max(t, align), align), LANE)
        # Guard: pathological d_in where forcing >=128 rows would exceed
        # physical VMEM -> degrade gracefully.
        if tile_rows * per_row + w_bytes > cap:
            tile_rows = max(_round_down(t, SUBLANE), SUBLANE)

    # Keep >= `cores` row tiles so megacore can shard the 'parallel' axis.
    if cores > 1 and tile_rows >= rows and rows >= 2 * LANE:
        tile_rows = max(_round_down(pl.cdiv(rows, cores), LANE), LANE)

    return tile_rows, tile_n


# --------------------- fused PreNorm + Linear kernel -------------------------
def _prenorm_linear_kernel(x_ref, gamma_ref, beta_ref, w_ref, b_ref, o_ref,
                           normed_ref, *, inv_d, n_pad, apply_affine):
    # Grid = (row_tiles, out_col_tiles).
    # INVARIANT: the output-column axis (grid axis 1) MUST be the innermost
    # grid axis and marked "arbitrary" (sequential) so the normalized tile
    # written at j == 0 stays valid in normed_ref for every j of this row
    # tile. Do not reorder the grid or mark axis 1 'parallel'.
    @pl.when(pl.program_id(1) == 0)
    def _():
        x = x_ref[...].astype(jnp.float32)
        if apply_affine:
            y = _layer_norm_rows(x, inv_d, n_pad, gamma_ref[...], beta_ref[...])
        else:
            y = _layer_norm_rows(x, inv_d, n_pad)
        normed_ref[...] = y.astype(normed_ref.dtype)

    # w is pre-cast to the compute dtype in the wrapper: no per-step VPU cast
    # between the weight DMA and the MXU push, and half the DMA bytes for bf16.
    acc = jnp.dot(normed_ref[...], w_ref[...], preferred_element_type=jnp.float32)
    o_ref[...] = (acc + b_ref[...]).astype(o_ref.dtype)


def prenorm_linear_pallas(x, gamma, beta, w, b, *, fold_ln_affine=False):
    """Fused PreNorm with fn = Linear: out = LayerNorm(x) @ w + b.

    x: (..., d_in), w: (d_in, d_out), b: (d_out,).
    fold_ln_affine=True folds gamma into w and beta into b on the host so the
    kernel only does (x - mean) * rsqrt(var + eps); tiny numeric difference.
    """
    *lead, d_in = x.shape
    d_out = w.shape[1]
    rows = 1
    for s in lead:
        rows *= s
    x2d = x.reshape(rows, d_in)

    cdt = _compute_dtype(x.dtype)

    # Optionally fold the LN affine into the linear layer (host-side, f32).
    if fold_ln_affine:
        w_f32 = w.astype(jnp.float32)
        w_eff = gamma.astype(jnp.float32)[:, None] * w_f32
        b_eff = beta.astype(jnp.float32) @ w_f32 + b.astype(jnp.float32)
    else:
        w_eff, b_eff = w, b

    # Lane-dense zero padding; only materialized when actually misaligned.
    d_in_p = _round_up(d_in, LANE)
    d_out_p = _round_up(d_out, LANE)
    xp = _pad_axis(x2d, d_in_p, 1)
    gp = _pad_axis(gamma.astype(jnp.float32).reshape(1, d_in), d_in_p, 1)
    bln = _pad_axis(beta.astype(jnp.float32).reshape(1, d_in), d_in_p, 1)
    wp = _pad_axis(_pad_axis(w_eff.astype(cdt), d_in_p, 0), d_out_p, 1)
    bp = _pad_axis(b_eff.astype(jnp.float32).reshape(1, d_out), d_out_p, 1)

    cap, align, cores = _tpu_info()
    x_itemsize = jnp.dtype(x.dtype).itemsize
    w_itemsize = jnp.dtype(cdt).itemsize
    tile_rows, tile_n = _choose_tiles(rows, d_in_p, d_out_p,
                                      x_itemsize, w_itemsize, cap, align, cores)
    grid = (pl.cdiv(rows, tile_rows), pl.cdiv(d_out_p, tile_n))

    est_vmem = (2 * tile_rows * d_in_p * x_itemsize        # x (double-buffered)
                + 2 * tile_rows * tile_n * x_itemsize      # out (double-buffered)
                + 2 * d_in_p * tile_n * w_itemsize         # w (double-buffered)
                + tile_rows * d_in_p * w_itemsize          # normed scratch
                + 8 * (d_in_p + tile_n) * 4)               # gamma/beta/bias
    vmem_limit = int(min(cap, max(est_vmem + 4 * MIB, 32 * MIB)))

    kernel = functools.partial(_prenorm_linear_kernel,
                               inv_d=1.0 / d_in,
                               n_pad=d_in_p - d_in,
                               apply_affine=not fold_ln_affine)
    out_p = pl.pallas_call(
        kernel,
        out_shape=jax.ShapeDtypeStruct((rows, d_out_p), x.dtype),
        grid_spec=pltpu.PrefetchScalarGridSpec(
            num_scalar_prefetch=0,
            grid=grid,
            in_specs=[
                pl.BlockSpec((tile_rows, d_in_p), lambda i, j: (i, 0)),   # x
                pl.BlockSpec((1, d_in_p), lambda i, j: (0, 0)),           # gamma
                pl.BlockSpec((1, d_in_p), lambda i, j: (0, 0)),           # beta
                pl.BlockSpec((d_in_p, tile_n), lambda i, j: (0, j)),      # w
                pl.BlockSpec((1, tile_n), lambda i, j: (0, j)),           # bias
            ],
            out_specs=pl.BlockSpec((tile_rows, tile_n), lambda i, j: (i, j)),
            scratch_shapes=[pltpu.VMEM((tile_rows, d_in_p), cdt)],
        ),
        compiler_params=pltpu.CompilerParams(
            # Row axis megacore-parallel; column axis MUST stay 'arbitrary'
            # (sequential, innermost) -- normed scratch is reused across j.
            dimension_semantics=("parallel", "arbitrary"),
            vmem_limit_bytes=vmem_limit,
        ),
    )(xp, gp, bln, wp, bp)

    out = out_p if d_out_p == d_out else out_p[:, :d_out]
    return out.reshape(*lead, d_out)


# ---------------------- fallback: LayerNorm-only kernel ----------------------
def _layernorm_kernel(x_ref, gamma_ref, beta_ref, o_ref, *, inv_d, n_pad):
    x = x_ref[...].astype(jnp.float32)
    y = _layer_norm_rows(x, inv_d, n_pad, gamma_ref[...], beta_ref[...])
    o_ref[...] = y.astype(o_ref.dtype)


def layernorm_pallas(x2d, gamma, beta):
    rows, d = x2d.shape
    d_p = _round_up(d, LANE)
    xp = _pad_axis(x2d, d_p, 1)
    gp = _pad_axis(gamma.astype(jnp.float32).reshape(1, d), d_p, 1)
    bp = _pad_axis(beta.astype(jnp.float32).reshape(1, d), d_p, 1)

    cap, _, cores = _tpu_info()
    itemsize = jnp.dtype(x2d.dtype).itemsize
    budget = int(cap * 0.5)
    per_row = 4 * d_p * itemsize                 # in + out, both double-buffered
    t = min(max(budget // per_row, SUBLANE), 4096)
    if rows <= t:
        tile_rows = rows
    else:
        # Mem-bound elementwise kernel: large lane-dense row tiles (>=512 when
        # the budget allows) to reach the HBM roofline.
        tile_rows = _round_down(t, LANE)
        if tile_rows == 0:
            tile_rows = max(_round_down(t, SUBLANE), SUBLANE)
    if cores > 1 and tile_rows >= rows and rows >= 2 * LANE:
        tile_rows = max(_round_down(pl.cdiv(rows, cores), LANE), LANE)
    grid = (pl.cdiv(rows, tile_rows),)

    est = 4 * tile_rows * d_p * itemsize + 8 * d_p * 4
    vmem_limit = int(min(cap, max(est + 4 * MIB, 32 * MIB)))

    kernel = functools.partial(_layernorm_kernel, inv_d=1.0 / d, n_pad=d_p - d)
    out_p = pl.pallas_call(
        kernel,
        out_shape=jax.ShapeDtypeStruct((rows, d_p), x2d.dtype),
        grid_spec=pltpu.PrefetchScalarGridSpec(
            num_scalar_prefetch=0,
            grid=grid,
            in_specs=[
                pl.BlockSpec((tile_rows, d_p), lambda i: (i, 0)),
                pl.BlockSpec((1, d_p), lambda i: (0, 0)),
                pl.BlockSpec((1, d_p), lambda i: (0, 0)),
            ],
            out_specs=pl.BlockSpec((tile_rows, d_p), lambda i: (i, 0)),
        ),
        compiler_params=pltpu.CompilerParams(
            dimension_semantics=("parallel",),
            vmem_limit_bytes=vmem_limit,
        ),
    )(xp, gp, bp)
    return out_p if d_p == d else out_p[:, :d]


def pre_norm(x, gamma, beta, fn, **kwargs):
    """Generic PreNorm.forward: fn(LayerNorm(x), **kwargs).
    Use `prenorm_linear_pallas` when `fn` is a plain Linear (fused fast path)."""
    *lead, d = x.shape
    rows = 1
    for s in lead:
        rows *= s
    normed = layernorm_pallas(x.reshape(rows, d), gamma, beta)
    out = fn(normed, **kwargs)
    return out.reshape(*lead, -1)


# ------------------------------------ main -----------------------------------
if __name__ == "__main__":
    key = jax.random.PRNGKey(0)
    B, L, D, D_OUT = 2, 8, 32, 32

    k_x, k_g, k_be, k_w, k_b = jax.random.split(key, 5)
    x = jax.random.normal(k_x, (B, L, D), dtype=jnp.float32)
    gamma = 1.0 + 0.1 * jax.random.normal(k_g, (D,), dtype=jnp.float32)
    beta = 0.05 * jax.random.normal(k_be, (D,), dtype=jnp.float32)
    w = jax.random.normal(k_w, (D, D_OUT), dtype=jnp.float32) * 0.02
    b = jax.random.normal(k_b, (D_OUT,), dtype=jnp.float32) * 0.01

    # Reference in plain JAX (LayerNorm + Linear).
    mean = jnp.mean(x, axis=-1, keepdims=True)
    var = jnp.mean((x - mean) ** 2, axis=-1, keepdims=True)
    normed_ref = (x - mean) / jnp.sqrt(var + LN_EPS) * gamma + beta
    ref = normed_ref @ w + b

    # 1) Fused PreNorm + Linear (single pallas_call).
    out = jax.block_until_ready(prenorm_linear_pallas(x, gamma, beta, w, b))
    assert out.shape == ref.shape
    assert jnp.allclose(out, ref, atol=1e-4, rtol=1e-4), "fused mismatch"

    # 2) Fused path with the LN affine folded into (w, b).
    out_fold = jax.block_until_ready(
        prenorm_linear_pallas(x, gamma, beta, w, b, fold_ln_affine=True))
    assert jnp.allclose(out_fold, ref, atol=1e-3, rtol=1e-3), "folded mismatch"

    # 3) bf16 inputs (weights pre-cast to bf16 in the wrapper, MXU-native).
    xb = x.astype(jnp.bfloat16)
    out_bf16 = jax.block_until_ready(prenorm_linear_pallas(xb, gamma, beta, w, b))
    assert jnp.allclose(out_bf16.astype(jnp.float32), ref, atol=5e-2, rtol=5e-2), \
        "bf16 mismatch"

    # 4) Generic fallback: Pallas LayerNorm kernel + arbitrary fn.
    out_fb = jax.block_until_ready(pre_norm(x, gamma, beta, lambda t: t @ w + b))
    assert jnp.allclose(out_fb, ref, atol=1e-4, rtol=1e-4), "fallback mismatch"

    print("KERNEL_OK")
</pallas_src>

<mosaic_0001>
module attributes {stable_mosaic.version = 11 : i64} {
  func.func @_prenorm_linear_kernel(%arg0: i32, %arg1: i32, %arg2: memref<16x128xf32, #tpu.memory_space<vmem>>, %arg3: memref<1x128xf32, #tpu.memory_space<vmem>>, %arg4: memref<1x128xf32, #tpu.memory_space<vmem>>, %arg5: memref<128x128xf32, #tpu.memory_space<vmem>>, %arg6: memref<1x128xf32, #tpu.memory_space<vmem>>, %arg7: memref<16x128xf32, #tpu.memory_space<vmem>>, %arg8: memref<16x128xf32, #tpu.memory_space<vmem>>) attributes {dimension_semantics = [#tpu.dimension_semantics<parallel>, #tpu.dimension_semantics<arbitrary>], iteration_bounds = array<i64: 1, 1>, scalar_prefetch = 0 : i64, scratch_operands = 1 : i64, tpu.core_type = #tpu.core_type<tc>, window_params = [{transform_indices = @transform_0, window_bounds = array<i64: 16, 128>}, {pipeline_mode = #tpu.pipeline_mode<synchronous>, transform_indices = @transform_1, window_bounds = array<i64: 1, 128>}, {pipeline_mode = #tpu.pipeline_mode<synchronous>, transform_indices = @transform_2, window_bounds = array<i64: 1, 128>}, {transform_indices = @transform_3, window_bounds = array<i64: 128, 128>}, {transform_indices = @transform_4, window_bounds = array<i64: 1, 128>}, {transform_indices = @transform_5, window_bounds = array<i64: 16, 128>}]} {
    %c0_i32 = arith.constant 0 : i32
    %0 = arith.cmpi eq, %arg1, %c0_i32 : i32
    %1 = arith.extui %0 : i1 to i32
    %c0_i32_0 = arith.constant 0 : i32
    %2 = arith.cmpi ne, %1, %c0_i32_0 : i32
    scf.if %2 {
      %c0_8 = arith.constant 0 : index
      %c0_9 = arith.constant 0 : index
      %10 = vector.load %arg2[%c0_8, %c0_9] : memref<16x128xf32, #tpu.memory_space<vmem>>, vector<16x128xf32>
      %c0_10 = arith.constant 0 : index
      %c0_11 = arith.constant 0 : index
      %11 = vector.load %arg3[%c0_10, %c0_11] : memref<1x128xf32, #tpu.memory_space<vmem>>, vector<1x128xf32>
      %c0_12 = arith.constant 0 : index
      %c0_13 = arith.constant 0 : index
      %12 = vector.load %arg4[%c0_12, %c0_13] : memref<1x128xf32, #tpu.memory_space<vmem>>, vector<1x128xf32>
      %cst_14 = arith.constant dense<0.000000e+00> : vector<16xf32>
      %13 = vector.multi_reduction <add>, %10, %cst_14 [1] : vector<16x128xf32> to vector<16xf32>
      %14 = vector.shape_cast %13 : vector<16xf32> to vector<16x1xf32>
      %cst_15 = arith.constant 3.125000e-02 : f32
      %15 = vector.broadcast %cst_15 : f32 to vector<16x1xf32>
      %16 = arith.mulf %14, %15 : vector<16x1xf32>
      %17 = vector.broadcast %16 : vector<16x1xf32> to vector<16x128xf32>
      %18 = arith.subf %10, %17 : vector<16x128xf32>
      %19 = arith.mulf %18, %18 : vector<16x128xf32>
      %cst_16 = arith.constant dense<0.000000e+00> : vector<16xf32>
      %20 = vector.multi_reduction <add>, %19, %cst_16 [1] : vector<16x128xf32> to vector<16xf32>
      %21 = vector.shape_cast %20 : vector<16xf32> to vector<16x1xf32>
      %22 = arith.mulf %16, %16 : vector<16x1xf32>
      %cst_17 = arith.constant 9.600000e+01 : f32
      %23 = vector.broadcast %cst_17 : f32 to vector<16x1xf32>
      %24 = arith.mulf %23, %22 : vector<16x1xf32>
      %25 = arith.subf %21, %24 : vector<16x1xf32>
      %cst_18 = arith.constant 3.125000e-02 : f32
      %26 = vector.broadcast %cst_18 : f32 to vector<16x1xf32>
      %27 = arith.mulf %25, %26 : vector<16x1xf32>
      %cst_19 = arith.constant 0.000000e+00 : f32
      %28 = vector.broadcast %cst_19 : f32 to vector<16x1xf32>
      %29 = arith.maximumf %27, %28 : vector<16x1xf32>
      %cst_20 = arith.constant 9.99999974E-6 : f32
      %30 = vector.broadcast %cst_20 : f32 to vector<16x1xf32>
      %31 = arith.addf %29, %30 : vector<16x1xf32>
      %32 = math.rsqrt %31 : vector<16x1xf32>
      %33 = vector.broadcast %32 : vector<16x1xf32> to vector<16x128xf32>
      %34 = arith.mulf %18, %33 : vector<16x128xf32>
      %35 = vector.broadcast %11 : vector<1x128xf32> to vector<16x128xf32>
      %36 = arith.mulf %34, %35 : vector<16x128xf32>
      %37 = vector.broadcast %12 : vector<1x128xf32> to vector<16x128xf32>
      %38 = arith.addf %36, %37 : vector<16x128xf32>
      %c0_21 = arith.constant 0 : index
      %c0_22 = arith.constant 0 : index
      %39 = vector.load %arg8[%c0_21, %c0_22] : memref<16x128xf32, #tpu.memory_space<vmem>>, vector<16x128xf32>
      tpu.vector_store %arg8[%c0_21, %c0_22], %38 {strides = array<i32>} : memref<16x128xf32, #tpu.memory_space<vmem>>, vector<16x128xf32>,
    } else {
    }
    %c0 = arith.constant 0 : index
    %c0_1 = arith.constant 0 : index
    %3 = vector.load %arg8[%c0, %c0_1] : memref<16x128xf32, #tpu.memory_space<vmem>>, vector<16x128xf32>
    %c0_2 = arith.constant 0 : index
    %c0_3 = arith.constant 0 : index
    %4 = vector.load %arg5[%c0_2, %c0_3] : memref<128x128xf32, #tpu.memory_space<vmem>>, vector<128x128xf32>
    %cst = arith.constant dense<0.000000e+00> : vector<16x128xf32>
    %5 = tpu.matmul %3, %4, %cst {dimension_numbers = #tpu.dot_dimension_numbers<[1], [0], [0], [1], [0, 0, 1, 1], [], []>} : vector<16x128xf32>, vector<128x128xf32>, vector<16x128xf32> -> vector<16x128xf32>
    %c0_4 = arith.constant 0 : index
    %c0_5 = arith.constant 0 : index
    %6 = vector.load %arg6[%c0_4, %c0_5] : memref<1x128xf32, #tpu.memory_space<vmem>>, vector<1x128xf32>
    %7 = vector.broadcast %6 : vector<1x128xf32> to vector<16x128xf32>
    %8 = arith.addf %5, %7 : vector<16x128xf32>
    %c0_6 = arith.constant 0 : index
    %c0_7 = arith.constant 0 : index
    %9 = vector.load %arg7[%c0_6, %c0_7] : memref<16x128xf32, #tpu.memory_space<vmem>>, vector<16x128xf32>
    tpu.vector_store %arg7[%c0_6, %c0_7], %8 {strides = array<i32>} : memref<16x128xf32, #tpu.memory_space<vmem>>, vector<16x128xf32>,
    return
  }
  func.func @transform_0(%arg0: i32, %arg1: i32) -> (i32, i32) {
    %c0_i32 = arith.constant 0 : i32
    %c0_i32_0 = arith.constant 0 : i32
    return %arg0, %c0_i32 : i32, i32
  }
  func.func @transform_1(%arg0: i32, %arg1: i32) -> (i32, i32) {
    %c0_i32 = arith.constant 0 : i32
    %c0_i32_0 = arith.constant 0 : i32
    %c0_i32_1 = arith.constant 0 : i32
    return %c0_i32, %c0_i32_0 : i32, i32
  }
  func.func @transform_2(%arg0: i32, %arg1: i32) -> (i32, i32) {
    %c0_i32 = arith.constant 0 : i32
    %c0_i32_0 = arith.constant 0 : i32
    %c0_i32_1 = arith.constant 0 : i32
    return %c0_i32, %c0_i32_0 : i32, i32
  }
  func.func @transform_3(%arg0: i32, %arg1: i32) -> (i32, i32) {
    %c0_i32 = arith.constant 0 : i32
    %c0_i32_0 = arith.constant 0 : i32
    return %c0_i32, %arg1 : i32, i32
  }
  func.func @transform_4(%arg0: i32, %arg1: i32) -> (i32, i32) {
    %c0_i32 = arith.constant 0 : i32
    %c0_i32_0 = arith.constant 0 : i32
    return %c0_i32, %arg1 : i32, i32
  }
  func.func @transform_5(%arg0: i32, %arg1: i32) -> (i32, i32) {
    %c0_i32 = arith.constant 0 : i32
    return %arg0, %arg1 : i32, i32
  }
}

</mosaic_0001>

<llo_original>
// kernel: tpu_custom_call.1
$region0: #{tpu_custom_call.1}
  #allocation0 [shape = 'u32[]', space=smem, size = 0x4, offset = 0x4, fixed_abs, tag = 'smem constant byte address 0x4 - core index']
  #allocation1 [shape = 'u32[144,128]{1,0:T(1,128)}', space=vmem, size = 0x12000, scoped, tag = 'internal scratch']
  #allocation2 [shape = 'f32[16,128]{1,0:T(8,128)}', space=vmem, size = 0x2000, scoped, tag = 'scratch operand']
  %s0 = inlined_call_operand.hbm [shape: f32[16,128], index: 0, kind: input, shape index: {}]
  %s1 = inlined_call_operand.vmem [shape: f32[1,128], index: 1, kind: input, shape index: {}]
  %s2 = inlined_call_operand.vmem [shape: f32[1,128], index: 2, kind: input, shape index: {}]
  %s3 = inlined_call_operand.hbm [shape: f32[128,128], index: 3, kind: input, shape index: {}]
  %s4 = inlined_call_operand.vmem [shape: f32[1,128], index: 4, kind: input, shape index: {}]
  %s5 = inlined_call_operand.hbm [shape: f32[16,128], index: 5, kind: output, shape index: {}]
  %s6 = sld [smem:[#allocation0]]
  $region42: #{tpu_custom_call.1} parent=0
    _
  %s8 = ssub.s32 1, %s6
  %s9 = scalar_select 0, %s8, %s6
  $region1: #{tpu_custom_call.1} parent=0
    #allocation3 [shape = 'u8[8192]{0}', space=vmem, size = 0x2000, scoped, tag = 'input window, operand 0, single buffered']
    #allocation4 [shape = 's32[1]{0}', space=sflag, size = 0x4, scoped, tag = 'scoped memory for tpu_custom_call.1']
    #allocation5 [shape = 's32[1]{0}', space=sflag, size = 0x4, scoped, tag = 'scoped memory for tpu_custom_call.1']
    #allocation6 [shape = 'u8[65536]{0}', space=vmem, size = 0x10000, scoped, tag = 'input window, operand 3, single buffered']
    #allocation7 [shape = 's32[1]{0}', space=sflag, size = 0x4, scoped, tag = 'scoped memory for tpu_custom_call.1']
    #allocation8 [shape = 'u8[8192]{0}', space=vmem, size = 0x2000, scoped, tag = 'output window, operand 0, single buffered']
    %10 = vsyncpa [#allocation4], 0
    %11 = vsyncpa [#allocation7], 0
    %12 = vsyncpa [#allocation5], 0
    // Predicated region
    $region2: #{tpu_custom_call.1} parent=1 // pred_check
      _
    $region3: #{tpu_custom_call.1} parent=1 // pred_check_branch
      %14 = sbr.rel (0) target = $region5
    $region4: #{tpu_custom_call.1} parent=1 // pred_region
      %s16 = ssub.s32 256, 256
      %17 = vsyncadd [#allocation4], %s16
      %s18 = sshll.u32 [#allocation3], 4
      %s19 = int_to_ptr.vmem [resolvable:$true] %s18
      %24 = dma.hbm_to_vmem [thread:$0]  %s0, 256, %s19, [#allocation4], 128, 128, 8
    $region5: #{tpu_custom_call.1} parent=1 // pred_fallthru
      _
    // Predicated region
    $region6: #{tpu_custom_call.1} parent=1 // pred_check
      _
    $region7: #{tpu_custom_call.1} parent=1 // pred_check_branch
      %26 = sbr.rel (0) target = $region9
    $region8: #{tpu_custom_call.1} parent=1 // pred_region
      _
    $region9: #{tpu_custom_call.1} parent=1 // pred_fallthru
      _
    // Predicated region
    $region10: #{tpu_custom_call.1} parent=1 // pred_check
      _
    $region11: #{tpu_custom_call.1} parent=1 // pred_check_branch
      %28 = sbr.rel (0) target = $region13
    $region12: #{tpu_custom_call.1} parent=1 // pred_region
      _
    $region13: #{tpu_custom_call.1} parent=1 // pred_fallthru
      _
    // Predicated region
    $region14: #{tpu_custom_call.1} parent=1 // pred_check
      _
    $region15: #{tpu_custom_call.1} parent=1 // pred_check_branch
      %30 = sbr.rel (0) target = $region17
    $region16: #{tpu_custom_call.1} parent=1 // pred_region
      %s32 = ssub.s32 2048, 2048
      %33 = vsyncadd [#allocation7], %s32
      %s34 = sshll.u32 [#allocation6], 4
      %s35 = int_to_ptr.vmem [resolvable:$true] %s34
      %40 = dma.hbm_to_vmem [thread:$0]  %s3, 2048, %s35, [#allocation7], 128, 128, 8
    $region17: #{tpu_custom_call.1} parent=1 // pred_fallthru
      _
    // Predicated region
    $region18: #{tpu_custom_call.1} parent=1 // pred_check
      _
    $region19: #{tpu_custom_call.1} parent=1 // pred_check_branch
      %42 = sbr.rel (0) target = $region21
    $region20: #{tpu_custom_call.1} parent=1 // pred_region
      _
    $region21: #{tpu_custom_call.1} parent=1 // pred_fallthru
      _
    // Predicated region
    $region22: #{tpu_custom_call.1} parent=1 // pred_check
      _
    $region23: #{tpu_custom_call.1} parent=1 // pred_check_branch
      %44 = sbr.rel (0) target = $region25
    $region24: #{tpu_custom_call.1} parent=1 // pred_region
      %45 = dma.done [#allocation4], 256
    $region25: #{tpu_custom_call.1} parent=1 // pred_fallthru
      _
    // Predicated region
    $region26: #{tpu_custom_call.1} parent=1 // pred_check
      _
    $region27: #{tpu_custom_call.1} parent=1 // pred_check_branch
      %47 = sbr.rel (0) target = $region29
    $region28: #{tpu_custom_call.1} parent=1 // pred_region
      %48 = dma.done [#allocation7], 2048
    $region29: #{tpu_custom_call.1} parent=1 // pred_fallthru
      _
    %p49 = scmp.eq.s32.totalorder 0, 0
    // Predicated region
    $region30: #{tpu_custom_call.1} parent=1 // pred_check
      %p50 = pneg %p49
    $region31: #{tpu_custom_call.1} parent=1 // pred_check_branch
      %52 = sbr.rel (%p50) target = $region33
    $region32: #{tpu_custom_call.1} parent=1 // pred_region
      %v53 = vld [vmem:[#allocation3] sm:$0xff]
      %v54 = vld [vmem:[#allocation3 + $0x8] sm:$0xff]
      %v55 = vld [vmem:[%s1] sm:$0x1]
      %v56 = vld [vmem:[%s2] sm:$0x1]
      %57 = vadd.xlane.f32.xlu0 %v53
      %v58 = vpop.xlane.xlu0 %57
      %59 = vadd.xlane.f32.xlu0 %v54
      %v60 = vpop.xlane.xlu0 %59
      %v61 = vmul.f32 %v58, 0.03125
      %v62 = vmul.f32 %v60, 0.03125
      %v63 = vsub.f32 %v53, %v61
      %v64 = vsub.f32 %v54, %v62
      %v65 = vmul.f32 %v63, %v63
      %v66 = vmul.f32 %v64, %v64
      %67 = vadd.xlane.f32.xlu0 %v65
      %v68 = vpop.xlane.xlu0 %67
      %69 = vadd.xlane.f32.xlu0 %v66
      %v70 = vpop.xlane.xlu0 %69
      %v71 = vmul.f32 %v61, %v61
      %v72 = vmul.f32 %v62, %v62
      %v73 = vmul.f32 %v71, 96.0
      %v74 = vmul.f32 %v72, 96.0
      %v75 = vsub.f32 %v68, %v73
      %v76 = vsub.f32 %v70, %v74
      %v77 = vmul.f32 %v75, 0.03125
      %v78 = vmul.f32 %v76, 0.03125
      %v79 = vmax.f32 %v77, 0.0
      %v80 = vmax.f32 %v78, 0.0
      %v81 = vadd.f32 %v79, 1e-05
      %v82 = vadd.f32 %v80, 1e-05
      %v83 = vrsqrt.pop %v81
      %v84 = vrsqrt.pop %v82
      %v85 = vmul.f32 %v63, %v83
      %v86 = vmul.f32 %v64, %v84
      %v88 = vlaneseq
      %v89 = vshrl.u32 %v88, 7
      %v90 = vsub.s32 0, %v89
      %v91 = vrot.slane %v55, %v90
      %v93 = vmul.f32 %v85, %v91
      %v94 = vmul.f32 %v86, %v91
      %v96 = vlaneseq
      %v97 = vshrl.u32 %v96, 7
      %v98 = vsub.s32 0, %v97
      %v99 = vrot.slane %v56, %v98
      %v101 = vadd.f32 %v93, %v99
      %v102 = vadd.f32 %v94, %v99
      %103 = vst [vmem:[#allocation2] sm:$0xff] %v101
      %104 = vst [vmem:[#allocation2 + $0x8] sm:$0xff] %v102
    $region33: #{tpu_custom_call.1} parent=1 // pred_fallthru
      _
    %v105 = vld [vmem:[#allocation2] sm:$0xff]
    %v106 = vld [vmem:[#allocation2 + $0x8] sm:$0xff]
    %v107 = vld [vmem:[#allocation6] sm:$0xff]
    %v108 = vld [vmem:[#allocation6 + $0x8] sm:$0xff]
    %v109 = vld [vmem:[#allocation6 + $0x10] sm:$0xff]
    %v110 = vld [vmem:[#allocation6 + $0x18] sm:$0xff]
    %v111 = vld [vmem:[#allocation6 + $0x20] sm:$0xff]
    %v112 = vld [vmem:[#allocation6 + $0x28] sm:$0xff]
    %v113 = vld [vmem:[#allocation6 + $0x30] sm:$0xff]
    %v114 = vld [vmem:[#allocation6 + $0x38] sm:$0xff]
    %v115 = vld [vmem:[#allocation6 + $0x40] sm:$0xff]
    %v116 = vld [vmem:[#allocation6 + $0x48] sm:$0xff]
    %v117 = vld [vmem:[#allocation6 + $0x50] sm:$0xff]
    %v118 = vld [vmem:[#allocation6 + $0x58] sm:$0xff]
    %v119 = vld [vmem:[#allocation6 + $0x60] sm:$0xff]
    %v120 = vld [vmem:[#allocation6 + $0x68] sm:$0xff]
    %v121 = vld [vmem:[#allocation6 + $0x70] sm:$0xff]
    %v122 = vld [vmem:[#allocation6 + $0x78] sm:$0xff]
    %v123 = vld [vmem:[%s4] sm:$0x1]
    %v125 = vlaneseq
    %v126 = vshrl.u32 %v125, 7
    %v127 = vsub.s32 0, %v126
    %v128 = vrot.slane %v123, %v127
    %130 = vmatprep.subr.mxu0 0.0
    %131 = vmatpush1.msra.mxu0 %v107
    %132 = vmatprep.subr.mxu0 0.0
    %133 = vmatpush1.msra.mxu0 %v108
    %134 = vmatprep.subr.mxu0 0.0
    %135 = vmatpush1.msra.mxu0 %v109
    %136 = vmatprep.subr.mxu0 0.0
    %137 = vmatpush1.msra.mxu0 %v110
    %138 = vmatprep.subr.mxu0 0.0
    %139 = vmatpush1.msra.mxu0 %v111
    %140 = vmatprep.subr.mxu0 0.0
    %141 = vmatpush1.msra.mxu0 %v112
    %142 = vmatprep.subr.mxu0 0.0
    %143 = vmatpush1.msra.mxu0 %v113
    %144 = vmatprep.subr.mxu0 0.0
    %145 = vmatpush1.msra.mxu0 %v114
    %146 = vmatprep.subr.mxu0 0.0
    %147 = vmatpush1.msra.mxu0 %v115
    %148 = vmatprep.subr.mxu0 0.0
    %149 = vmatpush1.msra.mxu0 %v116
    %150 = vmatprep.subr.mxu0 0.0
    %151 = vmatpush1.msra.mxu0 %v117
    %152 = vmatprep.subr.mxu0 0.0
    %153 = vmatpush1.msra.mxu0 %v118
    %154 = vmatprep.subr.mxu0 0.0
    %155 = vmatpush1.msra.mxu0 %v119
    %156 = vmatprep.subr.mxu0 0.0
    %157 = vmatpush1.msra.mxu0 %v120
    %158 = vmatprep.subr.mxu0 0.0
    %159 = vmatpush1.msra.mxu0 %v121
    %160 = vmatprep.subr.mxu0 0.0
    %161 = vmatpush1.msra.mxu0 %v122
    %162 = vmatprep.subr.mxu0 0.0
    %163 = vmatpush1.msra.mxu0 0.0
    %164 = vmatprep.subr.mxu0 0.0
    %165 = vmatpush1.msra.mxu0 0.0
    %166 = vmatprep.subr.mxu0 0.0
    %167 = vmatpush1.msra.mxu0 0.0
    %168 = vmatprep.subr.mxu0 0.0
    %169 = vmatpush1.msra.mxu0 0.0
    %170 = vmatprep.subr.mxu0 0.0
    %171 = vmatpush1.msra.mxu0 0.0
    %172 = vmatprep.subr.mxu0 0.0
    %173 = vmatpush1.msra.mxu0 0.0
    %174 = vmatprep.subr.mxu0 0.0
    %175 = vmatpush1.msra.mxu0 0.0
    %176 = vmatprep.subr.mxu0 0.0
    %177 = vmatpush1.msra.mxu0 0.0
    %178 = vmatprep.subr.mxu0 0.0
    %179 = vmatpush1.msra.mxu0 0.0
    %180 = vmatprep.subr.mxu0 0.0
    %181 = vmatpush1.msra.mxu0 0.0
    %182 = vmatprep.subr.mxu0 0.0
    %183 = vmatpush1.msra.mxu0 0.0
    %184 = vmatprep.subr.mxu0 0.0
    %185 = vmatpush1.msra.mxu0 0.0
    %186 = vmatprep.subr.mxu0 0.0
    %187 = vmatpush1.msra.mxu0 0.0
    %188 = vmatprep.subr.mxu0 0.0
    %189 = vmatpush1.msra.mxu0 0.0
    %190 = vmatprep.subr.mxu0 0.0
    %191 = vmatpush1.msra.mxu0 0.0
    %192 = vmatprep.subr.mxu0 0.0
    %193 = vmatpush1.msra.mxu0 0.0
    %194 = vmatprep.mubr.f32.mxu0 0.0
    %195 = vmatmul.mubr.f32.gmra.mrb[0].mxu0 %v105
    %v196 = vpop.f32.mrb[0].mxu0
    %v197 = vadd.f32 %v128, %v196
    %v198 = vpop.f32.mrb[0].mxu0
    %199 = vmatprep.mubr.f32.mxu0 0.0
    %200 = vmatmul.mubr.f32.gmra.mrb[0].mxu0 %v106
    %v201 = vpop.f32.mrb[0].mxu0
    %v202 = vadd.f32 %v128, %v201
    %v203 = vpop.f32.mrb[0].mxu0
    %204 = vdwg.mxu0
    %205 = vst [vmem:[#allocation8] sm:$0xff] %v197
    %206 = vst [vmem:[#allocation8 + $0x8] sm:$0xff] %v202
    // Predicated region
    $region34: #{tpu_custom_call.1} parent=1 // pred_check
      _
    $region35: #{tpu_custom_call.1} parent=1 // pred_check_branch
      %208 = sbr.rel (0) target = $region37
    $region36: #{tpu_custom_call.1} parent=1 // pred_region
      %s210 = ssub.s32 256, 256
      %211 = vsyncadd [#allocation5], %s210
      %s212 = sshll.u32 [#allocation8], 4
      %s213 = int_to_ptr.vmem [resolvable:$true] %s212
      %218 = dma.vmem_to_hbm [thread:$0]  %s213, 256, %s5, [#allocation5], 128, 128, 8
    $region37: #{tpu_custom_call.1} parent=1 // pred_fallthru
      _
    // Predicated region
    $region38: #{tpu_custom_call.1} parent=1 // pred_check
      _
    $region39: #{tpu_custom_call.1} parent=1 // pred_check_branch
      %220 = sbr.rel (0) target = $region41
    $region40: #{tpu_custom_call.1} parent=1 // pred_region
      %221 = dma.done [#allocation5], 256
    $region41: #{tpu_custom_call.1} parent=1 // pred_fallthru
      _
    %222 = vsyncpa [#allocation4], 1
    %223 = vsyncpa [#allocation7], 1
    %224 = vsyncpa [#allocation5], 1

</llo_original>
